<compile_context>
chip_gen: v7x
topology: tpu7x:2x2x1
jax: 0.10.0
libtpu: 0.0.40
codegen_flags: <defaults>
</compile_context>

<pallas_src>
import math

import jax
import jax.numpy as jnp
from jax import lax
from jax.experimental import pallas as pl
from jax.experimental.pallas import tpu as pltpu


def _round_up(x, m):
    return ((x + m - 1) // m) * m


def _nbytes(shape, dtype):
    n = 1
    for s in shape:
        n *= s
    return n * jnp.dtype(dtype).itemsize


def _make_kernel(*, has_bias, use_acc_scratch, mxu_dtype):
    """Kernel body for one (i, j, k) grid step.

    Ref order: x, wmu, wls, weps, [bmu, bls, beps], out, [acc scratch].
    """

    def kernel(x_ref, wmu_ref, wls_ref, weps_ref, *rest):
        idx = 0
        bmu_ref = bls_ref = beps_ref = None
        if has_bias:
            bmu_ref, bls_ref, beps_ref = rest[0], rest[1], rest[2]
            idx = 3
        o_ref = rest[idx]
        acc_ref = rest[idx + 1] if use_acc_scratch else o_ref

        k = pl.program_id(2)
        nk = pl.num_programs(2)

        @pl.when(k == 0)
        def _init():
            acc_ref[...] = jnp.zeros_like(acc_ref)

        # Reparameterization.  wls / weps are streamed in the MXU feed dtype
        # (bf16 by default), so exp() runs at bf16 EUP rate on v6e/v7x; the
        # mean stays f32 so sigma*eps is added to a full-precision mu.
        sigma_eps = jnp.exp(wls_ref[...]) * weps_ref[...]
        w = wmu_ref[...] + sigma_eps.astype(wmu_ref.dtype)

        x_tile = x_ref[...]
        if mxu_dtype is not None:
            w = w.astype(mxu_dtype)
            if x_tile.dtype != mxu_dtype:
                x_tile = x_tile.astype(mxu_dtype)

        # Contract x dim 1 with w dim 1: the weight tile stays (TN, TK) and
        # feeds the MXU directly (no materialized transpose / XLU vxpose).
        # TODO(synk): if pl.lower_as_mlir ever shows a relayout here,
        # pre-transpose weights to (K, N) in the wrapper instead.
        part = lax.dot_general(
            x_tile, w,
            dimension_numbers=(((1,), (1,)), ((), ())),
            preferred_element_type=jnp.float32)
        acc_ref[...] += part.astype(acc_ref.dtype)

        if has_bias or use_acc_scratch:
            @pl.when(k == nk - 1)
            def _epilogue():
                res = acc_ref[...].astype(jnp.float32)
                if has_bias:
                    bias = (bmu_ref[...].astype(jnp.float32)
                            + jnp.exp(bls_ref[...].astype(jnp.float32))
                            * beps_ref[...].astype(jnp.float32))
                    res = res + bias
                o_ref[...] = res.astype(o_ref.dtype)

    return kernel


def bayes_linear_forward(x, weight_mu, weight_log_sigma,
                         bias_mu=None, bias_log_sigma=None, *,
                         weight_eps=None, bias_eps=None,
                         rng_key=None, mxu_dtype=jnp.bfloat16,
                         tile_m=256, tile_n=512, tile_k=1024,
                         vmem_limit_bytes=None):
    """Pallas-fused BayesLinear forward.

    x:                    (B, in_features)
    weight_mu/log_sigma:  (out_features, in_features)
    bias_mu/log_sigma:    (out_features,) or None
    weight_eps/bias_eps:  optional frozen noise (module.freeze()); if omitted,
                          eps is sampled once per call with `rng_key`
                          (mirrors the default unfrozen forward()).
    mxu_dtype:            dtype fed to the MXU (default bf16; None = f32);
                          accumulation always stays f32.
    returns:              (B, out_features) in x.dtype.
    """
    B, K = x.shape
    N, K2 = weight_mu.shape
    assert K2 == K, "weight_mu must be (out_features, in_features)"

    has_bias = bias_mu is not None
    if has_bias:
        assert bias_log_sigma is not None

    # Unfrozen path: draw eps once per forward (one weight sample shared by
    # the whole batch) and run the fused frozen-style kernel.  This avoids
    # regenerating a (TN, TK) Gaussian tile on the EUP for every batch tile.
    if weight_eps is None:
        if rng_key is None:
            rng_key = jax.random.PRNGKey(0)
        k_w, k_b = jax.random.split(rng_key)
        weight_eps = jax.random.normal(k_w, weight_mu.shape, jnp.float32)
        if has_bias and bias_eps is None:
            bias_eps = jax.random.normal(k_b, (N,), jnp.float32)
    if has_bias:
        assert bias_eps is not None, "bias path needs bias_eps (or rng_key)"

    out_dtype = x.dtype
    stream_dtype = jnp.dtype(jnp.float32) if mxu_dtype is None \
        else jnp.dtype(mxu_dtype)
    mu_dtype = jnp.dtype(jnp.float32)   # mean stays full precision

    # Sublane alignment: f32 rows % 8, bf16 rows % 16 (packed sublanes).
    sub = 16 if stream_dtype.itemsize < 4 else 8
    TM = min(_round_up(tile_m, sub), _round_up(max(B, sub), sub))
    TN = min(_round_up(tile_n, 128), _round_up(N, 128))
    TK = min(_round_up(tile_k, 128), _round_up(K, 128))
    Mp, Np, Kp = _round_up(B, TM), _round_up(N, TN), _round_up(K, TK)

    def pad2(a, rows, cols, dt):
        a = a.astype(dt)
        return jnp.pad(a, ((0, rows - a.shape[0]), (0, cols - a.shape[1])))

    # Zero K-padding keeps the reduction exact; padded N rows/cols are sliced
    # off at the end.
    x_p = pad2(x, Mp, Kp, stream_dtype)
    wmu_p = pad2(weight_mu, Np, Kp, mu_dtype)
    wls_p = pad2(weight_log_sigma, Np, Kp, stream_dtype)
    weps_p = pad2(weight_eps, Np, Kp, stream_dtype)

    grid = (Mp // TM, Np // TN, Kp // TK)   # reduction axis K is innermost.

    x_spec = pl.BlockSpec((TM, TK), lambda i, j, k: (i, k))
    w_spec = pl.BlockSpec((TN, TK), lambda i, j, k: (j, k))
    b_spec = pl.BlockSpec((1, TN), lambda i, j, k: (0, j))
    o_spec = pl.BlockSpec((TM, TN), lambda i, j, k: (i, j))

    inputs = [x_p, wmu_p, wls_p, weps_p]
    in_specs = [x_spec, w_spec, w_spec, w_spec]
    if has_bias:
        inputs += [pad2(bias_mu.reshape(1, N), 1, Np, jnp.float32),
                   pad2(bias_log_sigma.reshape(1, N), 1, Np, jnp.float32),
                   pad2(bias_eps.reshape(1, N), 1, Np, jnp.float32)]
        in_specs += [b_spec, b_spec, b_spec]

    # f32 outputs accumulate directly into the resident output block; only
    # low-precision outputs need a separate f32 VMEM accumulator.
    use_acc_scratch = jnp.dtype(out_dtype) != jnp.dtype(jnp.float32)
    scratch_shapes = ([pltpu.VMEM((TM, TN), jnp.float32)]
                      if use_acc_scratch else [])

    if vmem_limit_bytes is None:
        # Double-buffered working-set estimate; raise the scoped-VMEM default
        # (16 MiB v5e / 32 MiB v6e+v7x) when needed, stay under v7x's 64 MiB.
        est = 2 * (_nbytes((TM, TK), stream_dtype)
                   + _nbytes((TN, TK), mu_dtype)
                   + 2 * _nbytes((TN, TK), stream_dtype))
        est += 2 * _nbytes((TM, TN), out_dtype)
        if has_bias:
            est += 2 * 3 * _nbytes((1, TN), jnp.float32)
        if use_acc_scratch:
            est += _nbytes((TM, TN), jnp.float32)
        vmem_limit_bytes = int(min(max(est * 13 // 10, 32 << 20), 60 << 20))

    kernel = _make_kernel(
        has_bias=has_bias, use_acc_scratch=use_acc_scratch,
        mxu_dtype=(None if mxu_dtype is None else jnp.dtype(mxu_dtype)))

    out = pl.pallas_call(
        kernel,
        out_shape=jax.ShapeDtypeStruct((Mp, Np), out_dtype),
        grid_spec=pltpu.PrefetchScalarGridSpec(
            num_scalar_prefetch=0,
            grid=grid,
            in_specs=in_specs,
            out_specs=o_spec,
            scratch_shapes=scratch_shapes),
        compiler_params=pltpu.CompilerParams(
            dimension_semantics=("parallel", "parallel", "arbitrary"),
            vmem_limit_bytes=vmem_limit_bytes),
    )(*inputs)

    return out[:B, :N]


def init_bayes_linear_params(key, in_features, out_features,
                             prior_mu=0.0, prior_sigma=0.1, bias=True,
                             dtype=jnp.float32):
    """Deterministic re-implementation of BayesLinear.reset_parameters()."""
    stdv = 1.0 / math.sqrt(in_features)
    k_w, k_b = jax.random.split(key)
    weight_mu = jax.random.uniform(
        k_w, (out_features, in_features), dtype=dtype, minval=-stdv, maxval=stdv)
    weight_log_sigma = jnp.full(
        (out_features, in_features), math.log(prior_sigma), dtype=dtype)
    params = dict(weight_mu=weight_mu, weight_log_sigma=weight_log_sigma)
    if bias:
        params["bias_mu"] = jax.random.uniform(
            k_b, (out_features,), dtype=dtype, minval=-stdv, maxval=stdv)
        params["bias_log_sigma"] = jnp.full(
            (out_features,), math.log(prior_sigma), dtype=dtype)
    return params


if __name__ == "__main__":
    B, IN, OUT = 8, 48, 40
    prior_sigma = 0.1

    key = jax.random.PRNGKey(0)
    k_params, k_x, k_weps, k_beps, k_unfrozen = jax.random.split(key, 5)

    params = init_bayes_linear_params(
        k_params, IN, OUT, prior_sigma=prior_sigma, bias=True)
    x = jax.random.normal(k_x, (B, IN), dtype=jnp.float32)

    # ---- frozen path (eps supplied, mirrors BayesLinear.freeze())
    weight_eps = jax.random.normal(k_weps, (OUT, IN), dtype=jnp.float32)
    bias_eps = jax.random.normal(k_beps, (OUT,), dtype=jnp.float32)

    w_ref = params["weight_mu"] + jnp.exp(params["weight_log_sigma"]) * weight_eps
    b_ref = params["bias_mu"] + jnp.exp(params["bias_log_sigma"]) * bias_eps
    y_ref = x @ w_ref.T + b_ref

    # f32 MXU feed: exact check.
    y_f32 = bayes_linear_forward(
        x, params["weight_mu"], params["weight_log_sigma"],
        params["bias_mu"], params["bias_log_sigma"],
        weight_eps=weight_eps, bias_eps=bias_eps, mxu_dtype=None)
    y_f32 = jax.block_until_ready(y_f32)
    assert y_f32.shape == (B, OUT)
    assert jnp.allclose(y_f32, y_ref, atol=1e-4, rtol=1e-4), (
        float(jnp.max(jnp.abs(y_f32 - y_ref))))

    # Default bf16 MXU feed (v5e/v6e/v7x MXUs are bf16-native), f32 accumulate.
    y_bf16 = bayes_linear_forward(
        x, params["weight_mu"], params["weight_log_sigma"],
        params["bias_mu"], params["bias_log_sigma"],
        weight_eps=weight_eps, bias_eps=bias_eps)
    y_bf16 = jax.block_until_ready(y_bf16)
    assert jnp.allclose(y_bf16, y_ref, atol=1e-1, rtol=5e-2), (
        float(jnp.max(jnp.abs(y_bf16 - y_ref))))

    # Frozen, no-bias path (exact, f32 feed).
    y_nb = bayes_linear_forward(
        x, params["weight_mu"], params["weight_log_sigma"],
        weight_eps=weight_eps, mxu_dtype=None)
    y_nb = jax.block_until_ready(y_nb)
    assert jnp.allclose(y_nb, x @ w_ref.T, atol=1e-4, rtol=1e-4)

    # ---- unfrozen path: eps sampled once per forward in the wrapper.
    y_u = bayes_linear_forward(
        x, params["weight_mu"], params["weight_log_sigma"],
        params["bias_mu"], params["bias_log_sigma"],
        rng_key=k_unfrozen)
    y_u = jax.block_until_ready(y_u)
    assert y_u.shape == (B, OUT)
    assert bool(jnp.all(jnp.isfinite(y_u)))
    assert float(jnp.std(y_u)) > 0.0

    print("KERNEL_OK")
</pallas_src>

<mosaic_0001>
module attributes {stable_mosaic.version = 11 : i64} {
  func.func @kernel(%arg0: i32, %arg1: i32, %arg2: i32, %arg3: memref<8x128xf32, #tpu.memory_space<vmem>>, %arg4: memref<128x128xf32, #tpu.memory_space<vmem>>, %arg5: memref<128x128xf32, #tpu.memory_space<vmem>>, %arg6: memref<128x128xf32, #tpu.memory_space<vmem>>, %arg7: memref<1x128xf32, #tpu.memory_space<vmem>>, %arg8: memref<1x128xf32, #tpu.memory_space<vmem>>, %arg9: memref<1x128xf32, #tpu.memory_space<vmem>>, %arg10: memref<8x128xf32, #tpu.memory_space<vmem>>) attributes {dimension_semantics = [#tpu.dimension_semantics<parallel>, #tpu.dimension_semantics<parallel>, #tpu.dimension_semantics<arbitrary>], iteration_bounds = array<i64: 1, 1, 1>, scalar_prefetch = 0 : i64, scratch_operands = 0 : i64, tpu.core_type = #tpu.core_type<tc>, window_params = [{transform_indices = @transform_0, window_bounds = array<i64: 8, 128>}, {transform_indices = @transform_1, window_bounds = array<i64: 128, 128>}, {transform_indices = @transform_2, window_bounds = array<i64: 128, 128>}, {transform_indices = @transform_3, window_bounds = array<i64: 128, 128>}, {transform_indices = @transform_4, window_bounds = array<i64: 1, 128>}, {transform_indices = @transform_5, window_bounds = array<i64: 1, 128>}, {transform_indices = @transform_6, window_bounds = array<i64: 1, 128>}, {transform_indices = @transform_7, window_bounds = array<i64: 8, 128>}]} {
    %c0_i32 = arith.constant 0 : i32
    %0 = arith.cmpi eq, %arg2, %c0_i32 : i32
    %1 = arith.extui %0 : i1 to i32
    %c0_i32_0 = arith.constant 0 : i32
    %2 = arith.cmpi ne, %1, %c0_i32_0 : i32
    scf.if %2 {
      %cst_14 = arith.constant 0.000000e+00 : f32
      %17 = vector.broadcast %cst_14 : f32 to vector<8x128xf32>
      %c0_15 = arith.constant 0 : index
      %c0_16 = arith.constant 0 : index
      %18 = vector.load %arg10[%c0_15, %c0_16] : memref<8x128xf32, #tpu.memory_space<vmem>>, vector<8x128xf32>
      tpu.vector_store %arg10[%c0_15, %c0_16], %17 {strides = array<i32>} : memref<8x128xf32, #tpu.memory_space<vmem>>, vector<8x128xf32>,
    } else {
    }
    %c0 = arith.constant 0 : index
    %c0_1 = arith.constant 0 : index
    %3 = vector.load %arg5[%c0, %c0_1] : memref<128x128xf32, #tpu.memory_space<vmem>>, vector<128x128xf32>
    %4 = math.exp %3 : vector<128x128xf32>
    %c0_2 = arith.constant 0 : index
    %c0_3 = arith.constant 0 : index
    %5 = vector.load %arg6[%c0_2, %c0_3] : memref<128x128xf32, #tpu.memory_space<vmem>>, vector<128x128xf32>
    %6 = arith.mulf %4, %5 : vector<128x128xf32>
    %c0_4 = arith.constant 0 : index
    %c0_5 = arith.constant 0 : index
    %7 = vector.load %arg4[%c0_4, %c0_5] : memref<128x128xf32, #tpu.memory_space<vmem>>, vector<128x128xf32>
    %8 = arith.addf %7, %6 : vector<128x128xf32>
    %c0_6 = arith.constant 0 : index
    %c0_7 = arith.constant 0 : index
    %9 = vector.load %arg3[%c0_6, %c0_7] : memref<8x128xf32, #tpu.memory_space<vmem>>, vector<8x128xf32>
    %cst = arith.constant dense<0.000000e+00> : vector<8x128xf32>
    %10 = tpu.matmul %9, %8, %cst {dimension_numbers = #tpu.dot_dimension_numbers<[1], [1], [0], [0], [0, 0, 1, 0], [], []>} : vector<8x128xf32>, vector<128x128xf32>, vector<8x128xf32> -> vector<8x128xf32>
    %c0_8 = arith.constant 0 : index
    %c0_9 = arith.constant 0 : index
    %11 = vector.load %arg10[%c0_8, %c0_9] : memref<8x128xf32, #tpu.memory_space<vmem>>, vector<8x128xf32>
    %12 = arith.addf %11, %10 : vector<8x128xf32>
    %c0_10 = arith.constant 0 : index
    %c0_11 = arith.constant 0 : index
    %13 = vector.load %arg10[%c0_10, %c0_11] : memref<8x128xf32, #tpu.memory_space<vmem>>, vector<8x128xf32>
    tpu.vector_store %arg10[%c0_10, %c0_11], %12 {strides = array<i32>} : memref<8x128xf32, #tpu.memory_space<vmem>>, vector<8x128xf32>,
    %c0_i32_12 = arith.constant 0 : i32
    %14 = arith.cmpi eq, %arg2, %c0_i32_12 : i32
    %15 = arith.extui %14 : i1 to i32
    %c0_i32_13 = arith.constant 0 : i32
    %16 = arith.cmpi ne, %15, %c0_i32_13 : i32
    scf.if %16 {
      %c0_14 = arith.constant 0 : index
      %c0_15 = arith.constant 0 : index
      %17 = vector.load %arg10[%c0_14, %c0_15] : memref<8x128xf32, #tpu.memory_space<vmem>>, vector<8x128xf32>
      %c0_16 = arith.constant 0 : index
      %c0_17 = arith.constant 0 : index
      %18 = vector.load %arg7[%c0_16, %c0_17] : memref<1x128xf32, #tpu.memory_space<vmem>>, vector<1x128xf32>
      %c0_18 = arith.constant 0 : index
      %c0_19 = arith.constant 0 : index
      %19 = vector.load %arg8[%c0_18, %c0_19] : memref<1x128xf32, #tpu.memory_space<vmem>>, vector<1x128xf32>
      %20 = math.exp %19 : vector<1x128xf32>
      %c0_20 = arith.constant 0 : index
      %c0_21 = arith.constant 0 : index
      %21 = vector.load %arg9[%c0_20, %c0_21] : memref<1x128xf32, #tpu.memory_space<vmem>>, vector<1x128xf32>
      %22 = arith.mulf %20, %21 : vector<1x128xf32>
      %23 = arith.addf %18, %22 : vector<1x128xf32>
      %24 = vector.broadcast %23 : vector<1x128xf32> to vector<8x128xf32>
      %25 = arith.addf %17, %24 : vector<8x128xf32>
      %c0_22 = arith.constant 0 : index
      %c0_23 = arith.constant 0 : index
      %26 = vector.load %arg10[%c0_22, %c0_23] : memref<8x128xf32, #tpu.memory_space<vmem>>, vector<8x128xf32>
      tpu.vector_store %arg10[%c0_22, %c0_23], %25 {strides = array<i32>} : memref<8x128xf32, #tpu.memory_space<vmem>>, vector<8x128xf32>,
    } else {
    }
    return
  }
  func.func @transform_0(%arg0: i32, %arg1: i32, %arg2: i32) -> (i32, i32) {
    %c0_i32 = arith.constant 0 : i32
    return %arg0, %arg2 : i32, i32
  }
  func.func @transform_1(%arg0: i32, %arg1: i32, %arg2: i32) -> (i32, i32) {
    %c0_i32 = arith.constant 0 : i32
    return %arg1, %arg2 : i32, i32
  }
  func.func @transform_2(%arg0: i32, %arg1: i32, %arg2: i32) -> (i32, i32) {
    %c0_i32 = arith.constant 0 : i32
    return %arg1, %arg2 : i32, i32
  }
  func.func @transform_3(%arg0: i32, %arg1: i32, %arg2: i32) -> (i32, i32) {
    %c0_i32 = arith.constant 0 : i32
    return %arg1, %arg2 : i32, i32
  }
  func.func @transform_4(%arg0: i32, %arg1: i32, %arg2: i32) -> (i32, i32) {
    %c0_i32 = arith.constant 0 : i32
    %c0_i32_0 = arith.constant 0 : i32
    return %c0_i32, %arg1 : i32, i32
  }
  func.func @transform_5(%arg0: i32, %arg1: i32, %arg2: i32) -> (i32, i32) {
    %c0_i32 = arith.constant 0 : i32
    %c0_i32_0 = arith.constant 0 : i32
    return %c0_i32, %arg1 : i32, i32
  }
  func.func @transform_6(%arg0: i32, %arg1: i32, %arg2: i32) -> (i32, i32) {
    %c0_i32 = arith.constant 0 : i32
    %c0_i32_0 = arith.constant 0 : i32
    return %c0_i32, %arg1 : i32, i32
  }
  func.func @transform_7(%arg0: i32, %arg1: i32, %arg2: i32) -> (i32, i32) {
    %c0_i32 = arith.constant 0 : i32
    return %arg0, %arg1 : i32, i32
  }
}

</mosaic_0001>

<llo_original>
// kernel: tpu_custom_call.1
$region0: #{tpu_custom_call.1}
  #allocation0 [shape = 'u32[]', space=smem, size = 0x4, offset = 0x4, fixed_abs, tag = 'smem constant byte address 0x4 - core index']
  #allocation1 [shape = 'u32[144,128]{1,0:T(1,128)}', space=vmem, size = 0x12000, scoped, tag = 'internal scratch']
  %s0 = inlined_call_operand.hbm [shape: f32[8,128], index: 0, kind: input, shape index: {}]
  %s1 = inlined_call_operand.hbm [shape: f32[128,128], index: 1, kind: input, shape index: {}]
  %s2 = inlined_call_operand.hbm [shape: f32[128,128], index: 2, kind: input, shape index: {}]
  %s3 = inlined_call_operand.hbm [shape: f32[128,128], index: 3, kind: input, shape index: {}]
  %s4 = inlined_call_operand.vmem [shape: f32[1,128], index: 4, kind: input, shape index: {}]
  %s5 = inlined_call_operand.vmem [shape: f32[1,128], index: 5, kind: input, shape index: {}]
  %s6 = inlined_call_operand.vmem [shape: f32[1,128], index: 6, kind: input, shape index: {}]
  %s7 = inlined_call_operand.hbm [shape: f32[8,128], index: 7, kind: output, shape index: {}]
  %s8 = sld [smem:[#allocation0]]
  $region62: #{tpu_custom_call.1} parent=0
    _
  %s10 = ssub.s32 1, %s8
  %s11 = scalar_select 0, %s10, %s8
  $region1: #{tpu_custom_call.1} parent=0
    #allocation2 [shape = 'u8[4096]{0}', space=vmem, size = 0x1000, scoped, tag = 'input window, operand 0, single buffered']
    #allocation3 [shape = 's32[1]{0}', space=sflag, size = 0x4, scoped, tag = 'scoped memory for tpu_custom_call.1']
    #allocation4 [shape = 's32[1]{0}', space=sflag, size = 0x4, scoped, tag = 'scoped memory for tpu_custom_call.1']
    #allocation5 [shape = 'u8[65536]{0}', space=vmem, size = 0x10000, scoped, tag = 'input window, operand 1, single buffered']
    #allocation6 [shape = 's32[1]{0}', space=sflag, size = 0x4, scoped, tag = 'scoped memory for tpu_custom_call.1']
    #allocation7 [shape = 'u8[65536]{0}', space=vmem, size = 0x10000, scoped, tag = 'input window, operand 2, single buffered']
    #allocation8 [shape = 'u8[65536]{0}', space=vmem, size = 0x10000, scoped, tag = 'input window, operand 3, single buffered']
    #allocation9 [shape = 's32[1]{0}', space=sflag, size = 0x4, scoped, tag = 'scoped memory for tpu_custom_call.1']
    #allocation10 [shape = 'u8[4096]{0}', space=vmem, size = 0x1000, scoped, tag = 'output window, operand 0, single buffered']
    %12 = vsyncpa [#allocation3], 0
    %13 = vsyncpa [#allocation6], 0
    %14 = vsyncpa [#allocation9], 0
    %15 = vsyncpa [#allocation4], 0
    // Predicated region
    $region2: #{tpu_custom_call.1} parent=1 // pred_check
      _
    $region3: #{tpu_custom_call.1} parent=1 // pred_check_branch
      %17 = sbr.rel (0) target = $region5
    $region4: #{tpu_custom_call.1} parent=1 // pred_region
      %s19 = ssub.s32 128, 128
      %20 = vsyncadd [#allocation3], %s19
      %s22 = sshll.u32 [#allocation2], 4
      %s23 = int_to_ptr.vmem [resolvable:$true] %s22
      %25 = dma.hbm_to_vmem [thread:$0]  %s0, 128, %s23, [#allocation3]
    $region5: #{tpu_custom_call.1} parent=1 // pred_fallthru
      _
    // Predicated region
    $region6: #{tpu_custom_call.1} parent=1 // pred_check
      _
    $region7: #{tpu_custom_call.1} parent=1 // pred_check_branch
      %27 = sbr.rel (0) target = $region9
    $region8: #{tpu_custom_call.1} parent=1 // pred_region
      %s29 = ssub.s32 2048, 2048
      %30 = vsyncadd [#allocation6], %s29
      %s31 = sshll.u32 [#allocation5], 4
      %s32 = int_to_ptr.vmem [resolvable:$true] %s31
      %37 = dma.hbm_to_vmem [thread:$0]  %s1, 2048, %s32, [#allocation6], 128, 128, 8
    $region9: #{tpu_custom_call.1} parent=1 // pred_fallthru
      _
    // Predicated region
    $region10: #{tpu_custom_call.1} parent=1 // pred_check
      _
    $region11: #{tpu_custom_call.1} parent=1 // pred_check_branch
      %39 = sbr.rel (0) target = $region13
    $region12: #{tpu_custom_call.1} parent=1 // pred_region
      %s41 = ssub.s32 2048, 2048
      %42 = vsyncadd [#allocation6], %s41
      %s43 = sshll.u32 [#allocation7], 4
      %s44 = int_to_ptr.vmem [resolvable:$true] %s43
      %49 = dma.hbm_to_vmem [thread:$0]  %s2, 2048, %s44, [#allocation6], 128, 128, 8
    $region13: #{tpu_custom_call.1} parent=1 // pred_fallthru
      _
    // Predicated region
    $region14: #{tpu_custom_call.1} parent=1 // pred_check
      _
    $region15: #{tpu_custom_call.1} parent=1 // pred_check_branch
      %51 = sbr.rel (0) target = $region17
    $region16: #{tpu_custom_call.1} parent=1 // pred_region
      %s53 = ssub.s32 2048, 2048
      %54 = vsyncadd [#allocation9], %s53
      %s55 = sshll.u32 [#allocation8], 4
      %s56 = int_to_ptr.vmem [resolvable:$true] %s55
      %61 = dma.hbm_to_vmem [thread:$0]  %s3, 2048, %s56, [#allocation9], 128, 128, 8
    $region17: #{tpu_custom_call.1} parent=1 // pred_fallthru
      _
    // Predicated region
    $region18: #{tpu_custom_call.1} parent=1 // pred_check
      _
    $region19: #{tpu_custom_call.1} parent=1 // pred_check_branch
      %63 = sbr.rel (0) target = $region21
    $region20: #{tpu_custom_call.1} parent=1 // pred_region
      _
    $region21: #{tpu_custom_call.1} parent=1 // pred_fallthru
      _
    // Predicated region
    $region22: #{tpu_custom_call.1} parent=1 // pred_check
      _
    $region23: #{tpu_custom_call.1} parent=1 // pred_check_branch
      %65 = sbr.rel (0) target = $region25
    $region24: #{tpu_custom_call.1} parent=1 // pred_region
      _
    $region25: #{tpu_custom_call.1} parent=1 // pred_fallthru
      _
    // Predicated region
    $region26: #{tpu_custom_call.1} parent=1 // pred_check
      _
    $region27: #{tpu_custom_call.1} parent=1 // pred_check_branch
      %67 = sbr.rel (0) target = $region29
    $region28: #{tpu_custom_call.1} parent=1 // pred_region
      _
    $region29: #{tpu_custom_call.1} parent=1 // pred_fallthru
      _
    // Predicated region
    $region30: #{tpu_custom_call.1} parent=1 // pred_check
      _
    $region31: #{tpu_custom_call.1} parent=1 // pred_check_branch
      %69 = sbr.rel (0) target = $region33
    $region32: #{tpu_custom_call.1} parent=1 // pred_region
      %70 = dma.done [#allocation3], 128
    $region33: #{tpu_custom_call.1} parent=1 // pred_fallthru
      _
    // Predicated region
    $region34: #{tpu_custom_call.1} parent=1 // pred_check
      _
    $region35: #{tpu_custom_call.1} parent=1 // pred_check_branch
      %72 = sbr.rel (0) target = $region37
    $region36: #{tpu_custom_call.1} parent=1 // pred_region
      %73 = dma.done [#allocation6], 2048
    $region37: #{tpu_custom_call.1} parent=1 // pred_fallthru
      _
    // Predicated region
    $region38: #{tpu_custom_call.1} parent=1 // pred_check
      _
    $region39: #{tpu_custom_call.1} parent=1 // pred_check_branch
      %75 = sbr.rel (0) target = $region41
    $region40: #{tpu_custom_call.1} parent=1 // pred_region
      %76 = dma.done [#allocation6], 2048
    $region41: #{tpu_custom_call.1} parent=1 // pred_fallthru
      _
    // Predicated region
    $region42: #{tpu_custom_call.1} parent=1 // pred_check
      _
    $region43: #{tpu_custom_call.1} parent=1 // pred_check_branch
      %78 = sbr.rel (0) target = $region45
    $region44: #{tpu_custom_call.1} parent=1 // pred_region
      %79 = dma.done [#allocation9], 2048
    $region45: #{tpu_custom_call.1} parent=1 // pred_fallthru
      _
    %p80 = scmp.eq.s32.totalorder 0, 0
    // Predicated region
    $region46: #{tpu_custom_call.1} parent=1 // pred_check
      %p81 = pneg %p80
    $region47: #{tpu_custom_call.1} parent=1 // pred_check_branch
      %83 = sbr.rel (%p81) target = $region49
    $region48: #{tpu_custom_call.1} parent=1 // pred_region
      %84 = vst [vmem:[#allocation10] sm:$0xff] 0.0
    $region49: #{tpu_custom_call.1} parent=1 // pred_fallthru
      _
    %v85 = vld [vmem:[#allocation7] sm:$0xff]
    %v86 = vld [vmem:[#allocation7 + $0x8] sm:$0xff]
    %v87 = vld [vmem:[#allocation7 + $0x10] sm:$0xff]
    %v88 = vld [vmem:[#allocation7 + $0x18] sm:$0xff]
    %v89 = vld [vmem:[#allocation7 + $0x20] sm:$0xff]
    %v90 = vld [vmem:[#allocation7 + $0x28] sm:$0xff]
    %v91 = vld [vmem:[#allocation7 + $0x30] sm:$0xff]
    %v92 = vld [vmem:[#allocation7 + $0x38] sm:$0xff]
    %v93 = vld [vmem:[#allocation7 + $0x40] sm:$0xff]
    %v94 = vld [vmem:[#allocation7 + $0x48] sm:$0xff]
    %v95 = vld [vmem:[#allocation7 + $0x50] sm:$0xff]
    %v96 = vld [vmem:[#allocation7 + $0x58] sm:$0xff]
    %v97 = vld [vmem:[#allocation7 + $0x60] sm:$0xff]
    %v98 = vld [vmem:[#allocation7 + $0x68] sm:$0xff]
    %v99 = vld [vmem:[#allocation7 + $0x70] sm:$0xff]
    %v100 = vld [vmem:[#allocation7 + $0x78] sm:$0xff]
    %v101 = vmul.f32 %v85, 1.442695
    %v102 = vpow.pop %v101
    %v103 = vmul.f32 %v86, 1.442695
    %v104 = vpow.pop %v103
    %v105 = vmul.f32 %v87, 1.442695
    %v106 = vpow.pop %v105
    %v107 = vmul.f32 %v88, 1.442695
    %v108 = vpow.pop %v107
    %v109 = vmul.f32 %v89, 1.442695
    %v110 = vpow.pop %v109
    %v111 = vmul.f32 %v90, 1.442695
    %v112 = vpow.pop %v111
    %v113 = vmul.f32 %v91, 1.442695
    %v114 = vpow.pop %v113
    %v115 = vmul.f32 %v92, 1.442695
    %v116 = vpow.pop %v115
    %v117 = vmul.f32 %v93, 1.442695
    %v118 = vpow.pop %v117
    %v119 = vmul.f32 %v94, 1.442695
    %v120 = vpow.pop %v119
    %v121 = vmul.f32 %v95, 1.442695
    %v122 = vpow.pop %v121
    %v123 = vmul.f32 %v96, 1.442695
    %v124 = vpow.pop %v123
    %v125 = vmul.f32 %v97, 1.442695
    %v126 = vpow.pop %v125
    %v127 = vmul.f32 %v98, 1.442695
    %v128 = vpow.pop %v127
    %v129 = vmul.f32 %v99, 1.442695
    %v130 = vpow.pop %v129
    %v131 = vmul.f32 %v100, 1.442695
    %v132 = vpow.pop %v131
    %v133 = vld [vmem:[#allocation8] sm:$0xff]
    %v134 = vld [vmem:[#allocation8 + $0x8] sm:$0xff]
    %v135 = vld [vmem:[#allocation8 + $0x10] sm:$0xff]
    %v136 = vld [vmem:[#allocation8 + $0x18] sm:$0xff]
    %v137 = vld [vmem:[#allocation8 + $0x20] sm:$0xff]
    %v138 = vld [vmem:[#allocation8 + $0x28] sm:$0xff]
    %v139 = vld [vmem:[#allocation8 + $0x30] sm:$0xff]
    %v140 = vld [vmem:[#allocation8 + $0x38] sm:$0xff]
    %v141 = vld [vmem:[#allocation8 + $0x40] sm:$0xff]
    %v142 = vld [vmem:[#allocation8 + $0x48] sm:$0xff]
    %v143 = vld [vmem:[#allocation8 + $0x50] sm:$0xff]
    %v144 = vld [vmem:[#allocation8 + $0x58] sm:$0xff]
    %v145 = vld [vmem:[#allocation8 + $0x60] sm:$0xff]
    %v146 = vld [vmem:[#allocation8 + $0x68] sm:$0xff]
    %v147 = vld [vmem:[#allocation8 + $0x70] sm:$0xff]
    %v148 = vld [vmem:[#allocation8 + $0x78] sm:$0xff]
    %v149 = vmul.f32 %v102, %v133
    %v150 = vmul.f32 %v104, %v134
    %v151 = vmul.f32 %v106, %v135
    %v152 = vmul.f32 %v108, %v136
    %v153 = vmul.f32 %v110, %v137
    %v154 = vmul.f32 %v112, %v138
    %v155 = vmul.f32 %v114, %v139
    %v156 = vmul.f32 %v116, %v140
    %v157 = vmul.f32 %v118, %v141
    %v158 = vmul.f32 %v120, %v142
    %v159 = vmul.f32 %v122, %v143
    %v160 = vmul.f32 %v124, %v144
    %v161 = vmul.f32 %v126, %v145
    %v162 = vmul.f32 %v128, %v146
    %v163 = vmul.f32 %v130, %v147
    %v164 = vmul.f32 %v132, %v148
    %v165 = vld [vmem:[#allocation5] sm:$0xff]
    %v166 = vld [vmem:[#allocation5 + $0x8] sm:$0xff]
    %v167 = vld [vmem:[#allocation5 + $0x10] sm:$0xff]
    %v168 = vld [vmem:[#allocation5 + $0x18] sm:$0xff]
    %v169 = vld [vmem:[#allocation5 + $0x20] sm:$0xff]
    %v170 = vld [vmem:[#allocation5 + $0x28] sm:$0xff]
    %v171 = vld [vmem:[#allocation5 + $0x30] sm:$0xff]
    %v172 = vld [vmem:[#allocation5 + $0x38] sm:$0xff]
    %v173 = vld [vmem:[#allocation5 + $0x40] sm:$0xff]
    %v174 = vld [vmem:[#allocation5 + $0x48] sm:$0xff]
    %v175 = vld [vmem:[#allocation5 + $0x50] sm:$0xff]
    %v176 = vld [vmem:[#allocation5 + $0x58] sm:$0xff]
    %v177 = vld [vmem:[#allocation5 + $0x60] sm:$0xff]
    %v178 = vld [vmem:[#allocation5 + $0x68] sm:$0xff]
    %v179 = vld [vmem:[#allocation5 + $0x70] sm:$0xff]
    %v180 = vld [vmem:[#allocation5 + $0x78] sm:$0xff]
    %v181 = vadd.f32 %v165, %v149
    %v182 = vadd.f32 %v166, %v150
    %v183 = vadd.f32 %v167, %v151
    %v184 = vadd.f32 %v168, %v152
    %v185 = vadd.f32 %v169, %v153
    %v186 = vadd.f32 %v170, %v154
    %v187 = vadd.f32 %v171, %v155
    %v188 = vadd.f32 %v172, %v156
    %v189 = vadd.f32 %v173, %v157
    %v190 = vadd.f32 %v174, %v158
    %v191 = vadd.f32 %v175, %v159
    %v192 = vadd.f32 %v176, %v160
    %v193 = vadd.f32 %v177, %v161
    %v194 = vadd.f32 %v178, %v162
    %v195 = vadd.f32 %v179, %v163
    %v196 = vadd.f32 %v180, %v164
    %v197 = vld [vmem:[#allocation2] sm:$0xff]
    %198 = vmatprep.subr.mxu0 0.0
    %199 = vmatpush1.xpose.msra.mxu0 %v181
    %200 = vmatprep.subr.mxu0 0.0
    %201 = vmatpush1.xpose.msra.mxu0 %v182
    %202 = vmatprep.subr.mxu0 0.0
    %203 = vmatpush1.xpose.msra.mxu0 %v183
    %204 = vmatprep.subr.mxu0 0.0
    %205 = vmatpush1.xpose.msra.mxu0 %v184
    %206 = vmatprep.subr.mxu0 0.0
    %207 = vmatpush1.xpose.msra.mxu0 %v185
    %208 = vmatprep.subr.mxu0 0.0
    %209 = vmatpush1.xpose.msra.mxu0 %v186
    %210 = vmatprep.subr.mxu0 0.0
    %211 = vmatpush1.xpose.msra.mxu0 %v187
    %212 = vmatprep.subr.mxu0 0.0
    %213 = vmatpush1.xpose.msra.mxu0 %v188
    %214 = vmatprep.subr.mxu0 0.0
    %215 = vmatpush1.xpose.msra.mxu0 %v189
    %216 = vmatprep.subr.mxu0 0.0
    %217 = vmatpush1.xpose.msra.mxu0 %v190
    %218 = vmatprep.subr.mxu0 0.0
    %219 = vmatpush1.xpose.msra.mxu0 %v191
    %220 = vmatprep.subr.mxu0 0.0
    %221 = vmatpush1.xpose.msra.mxu0 %v192
    %222 = vmatprep.subr.mxu0 0.0
    %223 = vmatpush1.xpose.msra.mxu0 %v193
    %224 = vmatprep.subr.mxu0 0.0
    %225 = vmatpush1.xpose.msra.mxu0 %v194
    %226 = vmatprep.subr.mxu0 0.0
    %227 = vmatpush1.xpose.msra.mxu0 %v195
    %228 = vmatprep.subr.mxu0 0.0
    %229 = vmatpush1.xpose.msra.mxu0 %v196
    %230 = vmatprep.subr.mxu0 0.0
    %231 = vmatpush1.xpose.msra.mxu0 0.0
    %232 = vmatprep.subr.mxu0 0.0
    %233 = vmatpush1.xpose.msra.mxu0 0.0
    %234 = vmatprep.subr.mxu0 0.0
    %235 = vmatpush1.xpose.msra.mxu0 0.0
    %236 = vmatprep.subr.mxu0 0.0
    %237 = vmatpush1.xpose.msra.mxu0 0.0
    %238 = vmatprep.subr.mxu0 0.0
    %239 = vmatpush1.xpose.msra.mxu0 0.0
    %240 = vmatprep.subr.mxu0 0.0
    %241 = vmatpush1.xpose.msra.mxu0 0.0
    %242 = vmatprep.subr.mxu0 0.0
    %243 = vmatpush1.xpose.msra.mxu0 0.0
    %244 = vmatprep.subr.mxu0 0.0
    %245 = vmatpush1.xpose.msra.mxu0 0.0
    %246 = vmatprep.subr.mxu0 0.0
    %247 = vmatpush1.xpose.msra.mxu0 0.0
    %248 = vmatprep.subr.mxu0 0.0
    %249 = vmatpush1.xpose.msra.mxu0 0.0
    %250 = vmatprep.subr.mxu0 0.0
    %251 = vmatpush1.xpose.msra.mxu0 0.0
    %252 = vmatprep.subr.mxu0 0.0
    %253 = vmatpush1.xpose.msra.mxu0 0.0
    %254 = vmatprep.subr.mxu0 0.0
    %255 = vmatpush1.xpose.msra.mxu0 0.0
    %256 = vmatprep.subr.mxu0 0.0
    %257 = vmatpush1.xpose.msra.mxu0 0.0
    %258 = vmatprep.subr.mxu0 0.0
    %259 = vmatpush1.xpose.msra.mxu0 0.0
    %260 = vmatprep.subr.mxu0 0.0
    %261 = vmatpush1.xpose.msra.mxu0 0.0
    %262 = vmatprep.mubr.f32.mxu0 0.0
    %263 = vmatmul.mubr.f32.gmra.mrb[0].mxu0 %v197
    %v264 = vpop.f32.mrb[0].mxu0
    %v265 = vadd.f32 0.0, %v264
    %v266 = vpop.f32.mrb[0].mxu0
    %267 = vdwg.mxu0
    %v268 = vld [vmem:[#allocation10] sm:$0xff]
    %v269 = vadd.f32 %v268, %v265
    %270 = vst [vmem:[#allocation10] sm:$0xff] %v269
    // Predicated region
    $region50: #{tpu_custom_call.1} parent=1 // pred_check
      %p271 = pneg %p80
    $region51: #{tpu_custom_call.1} parent=1 // pred_check_branch
      %273 = sbr.rel (%p271) target = $region53
    $region52: #{tpu_custom_call.1} parent=1 // pred_region
      %v274 = vld [vmem:[#allocation10] sm:$0xff]
      %v275 = vld [vmem:[%s4] sm:$0x1]
      %v276 = vld [vmem:[%s5] sm:$0x1]
      %v277 = vmul.f32 %v276, 1.442695
      %v278 = vpow.pop %v277
      %v279 = vld [vmem:[%s6] sm:$0x1]
      %v280 = vmul.f32 %v278, %v279
      %v281 = vadd.f32 %v275, %v280
      %v283 = vlaneseq
      %v284 = vshrl.u32 %v283, 7
      %v285 = vsub.s32 0, %v284
      %v286 = vrot.slane %v281, %v285
      %v288 = vadd.f32 %v274, %v286
      %289 = vst [vmem:[#allocation10] sm:$0xff] %v288
    $region53: #{tpu_custom_call.1} parent=1 // pred_fallthru
      _
    // Predicated region
    $region54: #{tpu_custom_call.1} parent=1 // pred_check
      _
    $region55: #{tpu_custom_call.1} parent=1 // pred_check_branch
      %291 = sbr.rel (0) target = $region57
    $region56: #{tpu_custom_call.1} parent=1 // pred_region
      %s293 = ssub.s32 128, 128
      %294 = vsyncadd [#allocation4], %s293
      %s296 = sshll.u32 [#allocation10], 4
      %s297 = int_to_ptr.vmem [resolvable:$true] %s296
      %299 = dma.vmem_to_hbm [thread:$0]  %s297, 128, %s7, [#allocation4]
    $region57: #{tpu_custom_call.1} parent=1 // pred_fallthru
      _
    // Predicated region
    $region58: #{tpu_custom_call.1} parent=1 // pred_check
      _
    $region59: #{tpu_custom_call.1} parent=1 // pred_check_branch
      %301 = sbr.rel (0) target = $region61
    $region60: #{tpu_custom_call.1} parent=1 // pred_region
      %302 = dma.done [#allocation4], 128
    $region61: #{tpu_custom_call.1} parent=1 // pred_fallthru
      _
    %303 = vsyncpa [#allocation3], 1
    %304 = vsyncpa [#allocation6], 1
    %305 = vsyncpa [#allocation9], 1
    %306 = vsyncpa [#allocation4], 1

</llo_original>
